<compile_context>
chip_gen: v7x
topology: tpu7x:2x2x1
jax: 0.10.0
libtpu: 0.0.40
codegen_flags: <defaults>
</compile_context>

<pallas_src>
import jax
import jax.numpy as jnp
from jax.experimental import pallas as pl
from jax.experimental.pallas import tpu as pltpu

LN_EPS = 1e-5  # torch.nn.LayerNorm default eps


# ------------------------------ small helpers ------------------------------

def _rup(n, m):
    return ((n + m - 1) // m) * m


def _lin_weight(key, fan_in, fan_out):
    # PyTorch Linear default init: U(-1/sqrt(fan_in), 1/sqrt(fan_in)); stored (in, out)
    bound = 1.0 / jnp.sqrt(jnp.float32(fan_in))
    return jax.random.uniform(key, (fan_in, fan_out), jnp.float32,
                              minval=-bound, maxval=bound)


def _alpha():
    # nn.PReLU() default init 0.25 (single shared parameter)
    return jnp.asarray(0.25, jnp.float32)


# --------------------------- raw (PyTorch-like) params ---------------------

def build_params(key, gene_nodes, image_nodes, latent_dim):
    keys = iter(jax.random.split(key, 64))
    p = {}

    # gene encoder: [Linear + PReLU]* , Linear(last, latent)   (all bias=False)
    p["enc_g_w"], p["enc_g_a"] = [], []
    for idx, node in enumerate(gene_nodes):
        if idx == len(gene_nodes) - 1:
            p["enc_g_w"].append(_lin_weight(next(keys), node, latent_dim))
            break
        p["enc_g_w"].append(_lin_weight(next(keys), node, gene_nodes[idx + 1]))
        p["enc_g_a"].append(_alpha())

    # image encoder
    p["enc_i_w"], p["enc_i_a"] = [], []
    for idx, node in enumerate(image_nodes):
        if idx == len(image_nodes) - 1:
            p["enc_i_w"].append(_lin_weight(next(keys), node, latent_dim))
            break
        p["enc_i_w"].append(_lin_weight(next(keys), node, image_nodes[idx + 1]))
        p["enc_i_a"].append(_alpha())

    # gene decoder: Linear(latent, rev[0]) then [PReLU, Linear(rev[i-1], rev[i])]
    rev_g = gene_nodes[::-1]
    p["dec_g_w"], p["dec_g_a"] = [], []
    for idx, node in enumerate(rev_g):
        if idx == 0:
            p["dec_g_w"].append(_lin_weight(next(keys), latent_dim, node))
            continue
        p["dec_g_a"].append(_alpha())
        p["dec_g_w"].append(_lin_weight(next(keys), rev_g[idx - 1], node))

    # image decoder: Linear(latent, rev[0]) then [LN(rev[i-1]), PReLU, Linear]
    rev_i = image_nodes[::-1]
    p["dec_i_w"], p["dec_i_a"], p["dec_i_g"], p["dec_i_b"] = [], [], [], []
    for idx, node in enumerate(rev_i):
        if idx == 0:
            p["dec_i_w"].append(_lin_weight(next(keys), latent_dim, node))
            continue
        p["dec_i_g"].append(jnp.ones((rev_i[idx - 1],), jnp.float32))
        p["dec_i_b"].append(jnp.zeros((rev_i[idx - 1],), jnp.float32))
        p["dec_i_a"].append(_alpha())
        p["dec_i_w"].append(_lin_weight(next(keys), rev_i[idx - 1], node))

    # combine = PReLU + Dropout(identity in eval)
    p["combine_a"] = _alpha()

    # classification head: Linear(latent,25) -> LN(25) -> PReLU -> Linear(25,1)
    p["cls_w1"] = _lin_weight(next(keys), latent_dim, 25)
    p["cls_ln_g"] = jnp.ones((25,), jnp.float32)
    p["cls_ln_b"] = jnp.zeros((25,), jnp.float32)
    p["cls_a"] = _alpha()
    p["cls_w2"] = _lin_weight(next(keys), 25, 1)

    # feature-selection biases and ordinal bias
    p["bias_g"] = 0.1 * (2.0 * jax.random.uniform(next(keys), (gene_nodes[0], 2)) - 1.0)
    p["bias_i"] = 0.1 * (2.0 * jax.random.uniform(next(keys), (image_nodes[0], 2)) - 1.0)
    p["bias_ordinal"] = jnp.zeros((1, 4), jnp.float32)
    return p


# ------------------------------ static layout plan ---------------------------

def build_plan(gene_nodes, image_nodes, latent_dim):
    # TODO(synk): the fused block-diagonal kernel assumes the gene and image
    # branches have equal depth (>= 2 layers); unequal-depth lists would need a
    # per-branch fallback path (as in the earlier non-fused kernel).
    assert len(gene_nodes) == len(image_nodes) and len(gene_nodes) >= 2
    n = len(gene_nodes)
    rev_g, rev_i = gene_nodes[::-1], image_nodes[::-1]
    lat_p = _rup(latent_dim, 128)

    plan = dict(n=n, gene_nodes=list(gene_nodes), image_nodes=list(image_nodes),
                latent_dim=latent_dim, lat_p=lat_p, rev_g=rev_g, rev_i=rev_i)

    # ---- encoder stages (block-diagonal gene|image) ----
    enc = []
    for d in range(n):
        gp_in, ip_in = _rup(gene_nodes[d], 128), _rup(image_nodes[d], 128)
        if d < n - 1:
            gp_out, ip_out = _rup(gene_nodes[d + 1], 128), _rup(image_nodes[d + 1], 128)
        else:
            gp_out, ip_out = lat_p, lat_p
        enc.append(dict(gp_in=gp_in, ip_in=ip_in, gp_out=gp_out, ip_out=ip_out,
                        in_w=gp_in + ip_in, out_w=gp_out + ip_out))
    plan["enc"] = enc
    plan["x_w"] = enc[0]["in_w"]

    # ---- decoder "slab" (stage 0: the three latent_c consumers column-packed) ----
    off_ig = rev_g[0]
    off_c = off_ig + rev_i[0]
    slab_w = _rup(off_c + 25, 128)
    plan.update(off_ig=off_ig, off_c=off_c, slab_w=slab_w)

    # ---- decoder stages k = 1 .. n-1 (block-diagonal gene|image, +cls at k=1) ----
    dec = []
    for k in range(1, n):
        gp_out, ip_out = _rup(rev_g[k], 128), _rup(rev_i[k], 128)
        if k == 1:
            in_w, g_in_off, i_in_off = slab_w, 0, off_ig
            g_in_n, i_in_n = rev_g[0], rev_i[0]
            out_w = gp_out + ip_out + 128          # + 128-wide cls block
        else:
            prev = dec[-1]
            in_w = prev["gp_out"] + prev["ip_out"]
            g_in_off, i_in_off = 0, prev["gp_out"]
            g_in_n, i_in_n = rev_g[k - 1], rev_i[k - 1]
            out_w = gp_out + ip_out
        dec.append(dict(in_w=in_w, out_w=out_w, gp_out=gp_out, ip_out=ip_out,
                        g_in_off=g_in_off, i_in_off=i_in_off,
                        g_in_n=g_in_n, i_in_n=i_in_n))
    plan["dec"] = dec
    plan["out_g_w"] = dec[-1]["gp_out"]
    plan["out_i_w"] = dec[-1]["ip_out"]

    # ---- logical weight shapes (fixed order) and same-shape stacking ----
    w_shapes = [(s["in_w"], s["out_w"]) for s in enc]
    w_shapes.append((lat_p, slab_w))
    w_shapes += [(s["in_w"], s["out_w"]) for s in dec]
    stack_shapes, stack_members, w_loc = [], [], []
    for shp in w_shapes:
        if shp not in stack_shapes:
            stack_shapes.append(shp)
            stack_members.append([])
        sid = stack_shapes.index(shp)
        w_loc.append((sid, len(stack_members[sid])))
        stack_members[sid].append(len(w_loc) - 1)
    plan.update(w_shapes=w_shapes, stack_shapes=stack_shapes, w_loc=w_loc,
                stack_sizes=[len(m) for m in stack_members])

    # ---- aux per-lane rows: masks, LN gamma/beta, PReLU alphas, ordinal bias ----
    rows = []
    for d in range(n - 1):
        rows.append((f"enc_alpha_{d}", enc[d]["out_w"]))
    rows.append(("combine_alpha", lat_p))
    for nm in ("mask_g", "mask_i", "gamma_i", "beta_i", "mask_c",
               "gamma_c", "beta_c", "alpha"):
        rows.append((f"s1_{nm}", slab_w))
    for k in range(2, n):
        w = dec[k - 1]["in_w"]
        for nm in ("mask_g", "mask_i", "gamma_i", "beta_i", "alpha"):
            rows.append((f"s{k}_{nm}", w))
    rows.append(("y_bias", 128))
    plan["rows"] = rows
    plan["row_idx"] = {nm: i for i, (nm, _) in enumerate(rows)}
    plan["row_w"] = {nm: w for nm, w in rows}
    plan["aux_w"] = max(w for _, w in rows)
    plan["n_rows"] = len(rows)
    return plan


# --------------------------- packed (kernel) params --------------------------

def pack_params(plan, p):
    n = plan["n"]
    rev_g, rev_i = plan["rev_g"], plan["rev_i"]
    latent_dim, lat_p, slab_w = plan["latent_dim"], plan["lat_p"], plan["slab_w"]
    off_ig, off_c = plan["off_ig"], plan["off_c"]

    # ---- logical weights (built in f32, cast to bf16 at the end) ----
    weights = []
    # encoders: block-diagonal gene|image per depth
    for d in range(n):
        e = plan["enc"][d]
        w = jnp.zeros((e["in_w"], e["out_w"]), jnp.float32)
        wg, wi = p["enc_g_w"][d], p["enc_i_w"][d]
        w = w.at[:wg.shape[0], :wg.shape[1]].set(wg)
        w = w.at[e["gp_in"]:e["gp_in"] + wi.shape[0],
                 e["gp_out"]:e["gp_out"] + wi.shape[1]].set(wi)
        weights.append(w)
    # stage 0: the three latent_c consumers column-packed
    w0 = jnp.zeros((lat_p, slab_w), jnp.float32)
    w0 = w0.at[:latent_dim, 0:rev_g[0]].set(p["dec_g_w"][0])
    w0 = w0.at[:latent_dim, off_ig:off_ig + rev_i[0]].set(p["dec_i_w"][0])
    w0 = w0.at[:latent_dim, off_c:off_c + 25].set(p["cls_w1"])
    weights.append(w0)
    # decoder stages (block-diagonal gene|image, + cls columns at stage 1)
    for k in range(1, n):
        s = plan["dec"][k - 1]
        w = jnp.zeros((s["in_w"], s["out_w"]), jnp.float32)
        wg, wi = p["dec_g_w"][k], p["dec_i_w"][k]
        w = w.at[s["g_in_off"]:s["g_in_off"] + wg.shape[0], 0:wg.shape[1]].set(wg)
        w = w.at[s["i_in_off"]:s["i_in_off"] + wi.shape[0],
                 s["gp_out"]:s["gp_out"] + wi.shape[1]].set(wi)
        if k == 1:
            c0 = s["gp_out"] + s["ip_out"]
            w = w.at[off_c:off_c + 25, c0:c0 + 4].set(jnp.tile(p["cls_w2"], (1, 4)))
        weights.append(w)

    # group same-shape weights into 3-D stacks -> one DMA per stack, bf16 bytes
    stacks = [[] for _ in plan["stack_shapes"]]
    for j, w in enumerate(weights):
        sid, _ = plan["w_loc"][j]
        stacks[sid].append(w)
    stacks = [jnp.stack(s).astype(jnp.bfloat16) for s in stacks]

    # ---- aux slab: masks / LN params / per-lane alphas / ordinal bias (f32) ----
    aux = jnp.zeros((plan["n_rows"], plan["aux_w"]), jnp.float32)

    def set_row(name, vec, off=0):
        nonlocal aux
        aux = aux.at[plan["row_idx"][name], off:off + vec.shape[0]].set(vec)

    def set_const(name, val, off, num):
        set_row(name, jnp.full((num,), val, jnp.float32), off)

    for d in range(n - 1):
        e = plan["enc"][d]
        set_const(f"enc_alpha_{d}", p["enc_g_a"][d], 0, e["gp_out"])
        set_const(f"enc_alpha_{d}", p["enc_i_a"][d], e["gp_out"], e["ip_out"])
    set_const("combine_alpha", p["combine_a"], 0, lat_p)

    # stage 1 (acts on the slab): gene passthrough | image LN | cls LN
    set_const("s1_mask_g", 1.0, 0, rev_g[0])
    set_const("s1_mask_i", 1.0, off_ig, rev_i[0])
    set_row("s1_gamma_i", p["dec_i_g"][0], off_ig)
    set_row("s1_beta_i", p["dec_i_b"][0], off_ig)
    set_const("s1_mask_c", 1.0, off_c, 25)
    set_row("s1_gamma_c", p["cls_ln_g"], off_c)
    set_row("s1_beta_c", p["cls_ln_b"], off_c)
    set_const("s1_alpha", p["dec_g_a"][0], 0, rev_g[0])
    set_const("s1_alpha", p["dec_i_a"][0], off_ig, rev_i[0])
    set_const("s1_alpha", p["cls_a"], off_c, 25)

    for k in range(2, n):
        s = plan["dec"][k - 1]
        set_const(f"s{k}_mask_g", 1.0, 0, s["g_in_n"])
        set_const(f"s{k}_mask_i", 1.0, s["i_in_off"], s["i_in_n"])
        set_row(f"s{k}_gamma_i", p["dec_i_g"][k - 1], s["i_in_off"])
        set_row(f"s{k}_beta_i", p["dec_i_b"][k - 1], s["i_in_off"])
        set_const(f"s{k}_alpha", p["dec_g_a"][k - 1], 0, s["g_in_n"])
        set_const(f"s{k}_alpha", p["dec_i_a"][k - 1], s["i_in_off"], s["i_in_n"])

    set_row("y_bias", p["bias_ordinal"].reshape(-1), 0)

    return {"stacks": stacks, "aux": aux,
            "bias_g": p["bias_g"], "bias_i": p["bias_i"]}


# ------------------------------ fused kernel --------------------------------

def _make_kernel(plan):
    n = plan["n"]
    n_stacks = len(plan["stack_shapes"])
    rev_i = plan["rev_i"]
    lat_p = plan["lat_p"]
    aux_w = plan["aux_w"]
    row_idx, row_w = plan["row_idx"], plan["row_w"]
    w_loc = plan["w_loc"]
    out_g_w = plan["out_g_w"]

    def kernel(x_ref, *refs):
        stack_refs = refs[:n_stacks]
        aux_ref = refs[n_stacks]
        out_g_ref, out_i_ref, out_y_ref = refs[n_stacks + 1:n_stacks + 4]

        def weight(j):
            sid, pos = w_loc[j]
            return stack_refs[sid][pos]                   # (rows, cols) bf16 tile

        def row(name):
            r = aux_ref[pl.ds(row_idx[name], 1), :]       # (1, aux_w) f32
            w = row_w[name]
            return r if w == aux_w else r[:, :w]

        def dot(a, w):
            # bf16 operands into the MXU, f32 accumulation; elementwise stays f32.
            return jnp.dot(a.astype(jnp.bfloat16), w,
                           preferred_element_type=jnp.float32)

        def prelu(x, alpha):                              # alpha: (1, width) per-lane
            return jnp.where(x >= 0.0, x, alpha * x)

        def masked_ln(h, mask, gamma, beta, d):
            # Two-pass LayerNorm over the `d` lanes selected by `mask`.
            # gamma/beta are zero outside those lanes, so the result only
            # contributes on them (other lanes come out exactly 0).
            inv_d = 1.0 / d
            hm = h * mask
            m = jnp.sum(hm, axis=-1, keepdims=True) * inv_d
            c = (h - m) * mask
            v = jnp.sum(c * c, axis=-1, keepdims=True) * inv_d
            return (h - m) * jax.lax.rsqrt(v + LN_EPS) * gamma + beta

        # ---------------- encoders (gene|image block-diagonal) ----------------
        h = x_ref[...]
        for d in range(n - 1):
            h = prelu(dot(h, weight(d)), row(f"enc_alpha_{d}"))
        h = dot(h, weight(n - 1))                         # [latent_g | latent_i]
        lat = (h[:, :lat_p] + h[:, lat_p:2 * lat_p]) * 0.5
        latent_c = prelu(lat, row("combine_alpha"))       # combine (Dropout = id)

        # ---- stage 0: all three latent_c consumers in one MXU dot -------------
        slab = dot(latent_c, weight(n))                   # (B, slab_w)

        # ---- decoder stage 1: gene(PReLU) | image(LN+PReLU) | cls(LN+PReLU) ---
        act = (row("s1_mask_g") * slab
               + masked_ln(slab, row("s1_mask_i"), row("s1_gamma_i"),
                           row("s1_beta_i"), rev_i[0])
               + masked_ln(slab, row("s1_mask_c"), row("s1_gamma_c"),
                           row("s1_beta_c"), 25))
        h = dot(prelu(act, row("s1_alpha")), weight(n + 1))
        c0 = h.shape[1] - 128
        y_pre = h[:, c0:]                                 # ordinal head (128 lanes)
        h = h[:, :c0]                                     # [gene | image] carry

        # ---- decoder stages k >= 2: gene(PReLU) | image(LN+PReLU) -------------
        for k in range(2, n):
            act = (row(f"s{k}_mask_g") * h
                   + masked_ln(h, row(f"s{k}_mask_i"), row(f"s{k}_gamma_i"),
                               row(f"s{k}_beta_i"), rev_i[k - 1]))
            h = dot(prelu(act, row(f"s{k}_alpha")), weight(n + k))

        out_g_ref[...] = h[:, :out_g_w]
        out_i_ref[...] = h[:, out_g_w:]
        # NOTE: padded lanes (>= 4) of out_y hold sigmoid(0) = 0.5; callers must
        # slice [:, :4] (the wrapper does).  Keep the 128-wide lane-dense store.
        out_y_ref[...] = jax.nn.sigmoid(y_pre + row("y_bias"))

    return kernel


# --------------------------------- forward ----------------------------------

def make_joint_forward(plan):
    kernel = _make_kernel(plan)
    n_stacks = len(plan["stack_shapes"])
    x_w = plan["x_w"]
    gi_p = plan["enc"][0]["gp_in"]
    out_g_w, out_i_w = plan["out_g_w"], plan["out_i_w"]
    g0, i0 = plan["gene_nodes"][0], plan["image_nodes"][0]

    w_bytes = sum(l * r * c * 2 for (r, c), l
                  in zip(plan["stack_shapes"], plan["stack_sizes"]))
    aux_bytes = plan["n_rows"] * plan["aux_w"] * 4
    flops_per_row = 2 * sum(r * c for (r, c) in plan["w_shapes"])

    def forward(packed, x_g, x_i):
        # feature-importance probabilities (tiny parameter-only math -> plain JAX)
        imp_g = jnp.exp(packed["bias_g"])
        imp_o_g = imp_g[:, 1] / jnp.sum(imp_g, axis=1)
        imp_i = jnp.exp(packed["bias_i"])
        imp_o_i = imp_i[:, 1] / jnp.sum(imp_i, axis=1)
        # TODO(synk): training-mode Gumbel-softmax gating / dropout not implemented
        # (eval mode: x_g_in = x_g, x_i_in = x_i).

        b = x_g.shape[0]
        tb = _rup(b, 8) if b <= 128 else 128              # batch tile (sublane mult of 8)
        b_pad = _rup(b, tb)
        n_tiles = b_pad // tb

        # fused, lane-concatenated input [x_g | x_i], zero-padded
        x = jnp.zeros((b_pad, x_w), jnp.float32)
        x = x.at[:b, :g0].set(x_g.astype(jnp.float32))
        x = x.at[:b, gi_p:gi_p + i0].set(x_i.astype(jnp.float32))

        in_block_bytes = tb * x_w * 4
        out_block_bytes = tb * (out_g_w + out_i_w + 128) * 4
        cost = pl.CostEstimate(
            flops=b_pad * flops_per_row,
            transcendentals=b_pad * (2 * plan["n"] + 128),
            bytes_accessed=b_pad * x_w * 4 + w_bytes + aux_bytes
                           + b_pad * (out_g_w + out_i_w + 128) * 4)
        vmem_limit = int(min(96 << 20,
                             max(32 << 20,
                                 4 * (in_block_bytes + out_block_bytes
                                      + w_bytes + aux_bytes) + (8 << 20))))

        fused = pl.pallas_call(
            kernel,
            out_shape=(jax.ShapeDtypeStruct((b_pad, out_g_w), jnp.float32),
                       jax.ShapeDtypeStruct((b_pad, out_i_w), jnp.float32),
                       jax.ShapeDtypeStruct((b_pad, 128), jnp.float32)),
            grid=(n_tiles,),
            in_specs=[pl.BlockSpec((tb, x_w), lambda i: (i, 0))]
                     + [pl.BlockSpec((l, r, c), lambda i: (0, 0, 0))
                        for (r, c), l in zip(plan["stack_shapes"], plan["stack_sizes"])]
                     + [pl.BlockSpec((plan["n_rows"], plan["aux_w"]),
                                     lambda i: (0, 0))],
            out_specs=(pl.BlockSpec((tb, out_g_w), lambda i: (i, 0)),
                       pl.BlockSpec((tb, out_i_w), lambda i: (i, 0)),
                       pl.BlockSpec((tb, 128), lambda i: (i, 0))),
            compiler_params=pltpu.CompilerParams(
                dimension_semantics=("parallel",),
                vmem_limit_bytes=vmem_limit),
            cost_estimate=cost,
        )
        out_g, out_i, out_y = fused(x, *packed["stacks"], packed["aux"])

        surrogate_g = out_g[:b, :g0]
        surrogate_i = out_i[:b, :i0]
        y_hat = out_y[:b, :4]
        return (surrogate_g, surrogate_i), y_hat, (imp_o_g, imp_o_i)

    return jax.jit(forward)


# --------------------------- pure-JAX reference ------------------------------

def reference_forward(p, x_g, x_i):
    def prelu(x, a):
        return jnp.where(x >= 0.0, x, a * x)

    def ln(x, g, b):
        m = jnp.mean(x, axis=-1, keepdims=True)
        v = jnp.mean((x - m) ** 2, axis=-1, keepdims=True)
        return (x - m) * jax.lax.rsqrt(v + LN_EPS) * g + b

    dot = lambda a, b: jnp.dot(a, b, precision=jax.lax.Precision.HIGHEST)

    h = x_g
    for i in range(len(p["enc_g_w"]) - 1):
        h = prelu(dot(h, p["enc_g_w"][i]), p["enc_g_a"][i])
    latent_g = dot(h, p["enc_g_w"][-1])

    h = x_i
    for i in range(len(p["enc_i_w"]) - 1):
        h = prelu(dot(h, p["enc_i_w"][i]), p["enc_i_a"][i])
    latent_i = dot(h, p["enc_i_w"][-1])

    latent_c = prelu((latent_g + latent_i) * 0.5, p["combine_a"])

    h = dot(latent_c, p["dec_g_w"][0])
    for i in range(1, len(p["dec_g_w"])):
        h = dot(prelu(h, p["dec_g_a"][i - 1]), p["dec_g_w"][i])
    sur_g = h

    h = dot(latent_c, p["dec_i_w"][0])
    for i in range(1, len(p["dec_i_w"])):
        h = ln(h, p["dec_i_g"][i - 1], p["dec_i_b"][i - 1])
        h = dot(prelu(h, p["dec_i_a"][i - 1]), p["dec_i_w"][i])
    sur_i = h

    h = dot(latent_c, p["cls_w1"])
    h = prelu(ln(h, p["cls_ln_g"], p["cls_ln_b"]), p["cls_a"])
    y = dot(h, p["cls_w2"])
    y_hat = jax.nn.sigmoid(jnp.tile(y, (1, 4)) + p["bias_ordinal"])
    return sur_g, sur_i, y_hat


# ----------------------------------- main ------------------------------------

if __name__ == "__main__":
    gene_nodes = [32, 16]
    image_nodes = [64, 32]
    latent_dim = 8
    batch = 4

    key = jax.random.PRNGKey(0)
    k_param, k_xg, k_xi = jax.random.split(key, 3)

    raw = build_params(k_param, gene_nodes, image_nodes, latent_dim)
    plan = build_plan(gene_nodes, image_nodes, latent_dim)
    packed = pack_params(plan, raw)

    x_g = jax.random.normal(k_xg, (batch, gene_nodes[0]), jnp.float32)
    x_i = jax.random.normal(k_xi, (batch, image_nodes[0]), jnp.float32)

    fwd = make_joint_forward(plan)
    (sur_g, sur_i), y_hat, (prob_g, prob_i) = fwd(packed, x_g, x_i)
    jax.block_until_ready((sur_g, sur_i, y_hat, prob_g, prob_i))

    assert sur_g.shape == (batch, gene_nodes[0])
    assert sur_i.shape == (batch, image_nodes[0])
    assert y_hat.shape == (batch, 4)
    assert prob_g.shape == (gene_nodes[0],)
    assert prob_i.shape == (image_nodes[0],)

    # Precision contract: kernel matmuls use bf16 operands with f32 accumulation
    # (MXU-native), so agreement with the f32 HIGHEST-precision reference is at
    # the ~1e-2 level; layout/semantic bugs would show up as O(1) errors.
    r_g, r_i, r_y = reference_forward(raw, x_g, x_i)
    tol = dict(atol=5e-2, rtol=5e-2)
    assert jnp.allclose(sur_g, r_g, **tol), "surrogate_g mismatch"
    assert jnp.allclose(sur_i, r_i, **tol), "surrogate_i mismatch"
    assert jnp.allclose(y_hat, r_y, **tol), "y_hat mismatch"

    print("KERNEL_OK")
</pallas_src>

<mosaic_0001>
module attributes {stable_mosaic.version = 11 : i64} {
  func.func @kernel(%arg0: i32, %arg1: memref<8x256xf32, #tpu.memory_space<vmem>>, %arg2: memref<2x256x256xbf16, #tpu.memory_space<vmem>>, %arg3: memref<1x128x128xbf16, #tpu.memory_space<vmem>>, %arg4: memref<1x128x384xbf16, #tpu.memory_space<vmem>>, %arg5: memref<11x256xf32, #tpu.memory_space<vmem>>, %arg6: memref<8x128xf32, #tpu.memory_space<vmem>>, %arg7: memref<8x128xf32, #tpu.memory_space<vmem>>, %arg8: memref<8x128xf32, #tpu.memory_space<vmem>>) attributes {dimension_semantics = [#tpu.dimension_semantics<parallel>], iteration_bounds = array<i64: 1>, scalar_prefetch = 0 : i64, scratch_operands = 0 : i64, tpu.core_type = #tpu.core_type<tc>, window_params = [{transform_indices = @transform_0, window_bounds = array<i64: 8, 256>}, {pipeline_mode = #tpu.pipeline_mode<synchronous>, transform_indices = @transform_1, window_bounds = array<i64: 2, 256, 256>}, {pipeline_mode = #tpu.pipeline_mode<synchronous>, transform_indices = @transform_2, window_bounds = array<i64: 1, 128, 128>}, {pipeline_mode = #tpu.pipeline_mode<synchronous>, transform_indices = @transform_3, window_bounds = array<i64: 1, 128, 384>}, {pipeline_mode = #tpu.pipeline_mode<synchronous>, transform_indices = @transform_4, window_bounds = array<i64: 11, 256>}, {transform_indices = @transform_5, window_bounds = array<i64: 8, 128>}, {transform_indices = @transform_6, window_bounds = array<i64: 8, 128>}, {transform_indices = @transform_7, window_bounds = array<i64: 8, 128>}]} {
    %c0 = arith.constant 0 : index
    %c0_0 = arith.constant 0 : index
    %0 = vector.load %arg1[%c0, %c0_0] : memref<8x256xf32, #tpu.memory_space<vmem>>, vector<8x256xf32>
    %c0_1 = arith.constant 0 : index
    %c0_2 = arith.constant 0 : index
    %c0_3 = arith.constant 0 : index
    %1 = vector.load %arg2[%c0_1, %c0_2, %c0_3] : memref<2x256x256xbf16, #tpu.memory_space<vmem>>, vector<1x256x256xbf16>
    %2 = vector.shape_cast %1 : vector<1x256x256xbf16> to vector<256x256xbf16>
    %3 = arith.truncf %0 : vector<8x256xf32> to vector<8x256xbf16>
    %cst = arith.constant dense<0.000000e+00> : vector<8x256xf32>
    %4 = tpu.matmul %3, %2, %cst {dimension_numbers = #tpu.dot_dimension_numbers<[1], [0], [0], [1], [0, 0, 1, 1], [], []>} : vector<8x256xbf16>, vector<256x256xbf16>, vector<8x256xf32> -> vector<8x256xf32>
    %c0_4 = arith.constant 0 : index
    %c0_5 = arith.constant 0 : index
    %5 = vector.load %arg5[%c0_4, %c0_5] : memref<11x256xf32, #tpu.memory_space<vmem>>, vector<1x256xf32>
    %cst_6 = arith.constant 0.000000e+00 : f32
    %6 = vector.broadcast %cst_6 : f32 to vector<8x256xf32>
    %7 = arith.cmpf oge, %4, %6 : vector<8x256xf32>
    %8 = vector.broadcast %5 : vector<1x256xf32> to vector<8x256xf32>
    %9 = arith.mulf %8, %4 : vector<8x256xf32>
    %10 = arith.select %7, %4, %9 : vector<8x256xi1>, vector<8x256xf32>
    %c1 = arith.constant 1 : index
    %c0_7 = arith.constant 0 : index
    %c0_8 = arith.constant 0 : index
    %11 = vector.load %arg2[%c1, %c0_7, %c0_8] : memref<2x256x256xbf16, #tpu.memory_space<vmem>>, vector<1x256x256xbf16>
    %12 = vector.shape_cast %11 : vector<1x256x256xbf16> to vector<256x256xbf16>
    %13 = arith.truncf %10 : vector<8x256xf32> to vector<8x256xbf16>
    %cst_9 = arith.constant dense<0.000000e+00> : vector<8x256xf32>
    %14 = tpu.matmul %13, %12, %cst_9 {dimension_numbers = #tpu.dot_dimension_numbers<[1], [0], [0], [1], [0, 0, 1, 1], [], []>} : vector<8x256xbf16>, vector<256x256xbf16>, vector<8x256xf32> -> vector<8x256xf32>
    %15 = vector.extract_strided_slice %14 {offsets = [0, 0], sizes = [8, 128], strides = [1, 1]} : vector<8x256xf32> to vector<8x128xf32>
    %16 = vector.extract_strided_slice %14 {offsets = [0, 128], sizes = [8, 128], strides = [1, 1]} : vector<8x256xf32> to vector<8x128xf32>
    %17 = arith.addf %15, %16 : vector<8x128xf32>
    %cst_10 = arith.constant 5.000000e-01 : f32
    %18 = vector.broadcast %cst_10 : f32 to vector<8x128xf32>
    %19 = arith.mulf %17, %18 : vector<8x128xf32>
    %c1_11 = arith.constant 1 : index
    %c0_12 = arith.constant 0 : index
    %20 = vector.load %arg5[%c1_11, %c0_12] : memref<11x256xf32, #tpu.memory_space<vmem>>, vector<1x256xf32>
    %21 = vector.extract_strided_slice %20 {offsets = [0, 0], sizes = [1, 128], strides = [1, 1]} : vector<1x256xf32> to vector<1x128xf32>
    %cst_13 = arith.constant 0.000000e+00 : f32
    %22 = vector.broadcast %cst_13 : f32 to vector<8x128xf32>
    %23 = arith.cmpf oge, %19, %22 : vector<8x128xf32>
    %24 = vector.broadcast %21 : vector<1x128xf32> to vector<8x128xf32>
    %25 = arith.mulf %24, %19 : vector<8x128xf32>
    %26 = arith.select %23, %19, %25 : vector<8x128xi1>, vector<8x128xf32>
    %c0_14 = arith.constant 0 : index
    %c0_15 = arith.constant 0 : index
    %c0_16 = arith.constant 0 : index
    %27 = vector.load %arg3[%c0_14, %c0_15, %c0_16] : memref<1x128x128xbf16, #tpu.memory_space<vmem>>, vector<1x128x128xbf16>
    %28 = vector.shape_cast %27 : vector<1x128x128xbf16> to vector<128x128xbf16>
    %29 = arith.truncf %26 : vector<8x128xf32> to vector<8x128xbf16>
    %cst_17 = arith.constant dense<0.000000e+00> : vector<8x128xf32>
    %30 = tpu.matmul %29, %28, %cst_17 {dimension_numbers = #tpu.dot_dimension_numbers<[1], [0], [0], [1], [0, 0, 1, 1], [], []>} : vector<8x128xbf16>, vector<128x128xbf16>, vector<8x128xf32> -> vector<8x128xf32>
    %c2 = arith.constant 2 : index
    %c0_18 = arith.constant 0 : index
    %31 = vector.load %arg5[%c2, %c0_18] : memref<11x256xf32, #tpu.memory_space<vmem>>, vector<1x256xf32>
    %32 = vector.extract_strided_slice %31 {offsets = [0, 0], sizes = [1, 128], strides = [1, 1]} : vector<1x256xf32> to vector<1x128xf32>
    %33 = vector.broadcast %32 : vector<1x128xf32> to vector<8x128xf32>
    %34 = arith.mulf %33, %30 : vector<8x128xf32>
    %c3 = arith.constant 3 : index
    %c0_19 = arith.constant 0 : index
    %35 = vector.load %arg5[%c3, %c0_19] : memref<11x256xf32, #tpu.memory_space<vmem>>, vector<1x256xf32>
    %36 = vector.extract_strided_slice %35 {offsets = [0, 0], sizes = [1, 128], strides = [1, 1]} : vector<1x256xf32> to vector<1x128xf32>
    %c4 = arith.constant 4 : index
    %c0_20 = arith.constant 0 : index
    %37 = vector.load %arg5[%c4, %c0_20] : memref<11x256xf32, #tpu.memory_space<vmem>>, vector<1x256xf32>
    %38 = vector.extract_strided_slice %37 {offsets = [0, 0], sizes = [1, 128], strides = [1, 1]} : vector<1x256xf32> to vector<1x128xf32>
    %c5 = arith.constant 5 : index
    %c0_21 = arith.constant 0 : index
    %39 = vector.load %arg5[%c5, %c0_21] : memref<11x256xf32, #tpu.memory_space<vmem>>, vector<1x256xf32>
    %40 = vector.extract_strided_slice %39 {offsets = [0, 0], sizes = [1, 128], strides = [1, 1]} : vector<1x256xf32> to vector<1x128xf32>
    %41 = vector.broadcast %36 : vector<1x128xf32> to vector<8x128xf32>
    %42 = arith.mulf %30, %41 : vector<8x128xf32>
    %cst_22 = arith.constant dense<0.000000e+00> : vector<8xf32>
    %43 = vector.multi_reduction <add>, %42, %cst_22 [1] : vector<8x128xf32> to vector<8xf32>
    %44 = vector.shape_cast %43 : vector<8xf32> to vector<8x1xf32>
    %cst_23 = arith.constant 3.125000e-02 : f32
    %45 = vector.broadcast %cst_23 : f32 to vector<8x1xf32>
    %46 = arith.mulf %44, %45 : vector<8x1xf32>
    %47 = vector.broadcast %46 : vector<8x1xf32> to vector<8x128xf32>
    %48 = arith.subf %30, %47 : vector<8x128xf32>
    %49 = vector.broadcast %36 : vector<1x128xf32> to vector<8x128xf32>
    %50 = arith.mulf %48, %49 : vector<8x128xf32>
    %51 = arith.mulf %50, %50 : vector<8x128xf32>
    %cst_24 = arith.constant dense<0.000000e+00> : vector<8xf32>
    %52 = vector.multi_reduction <add>, %51, %cst_24 [1] : vector<8x128xf32> to vector<8xf32>
    %53 = vector.shape_cast %52 : vector<8xf32> to vector<8x1xf32>
    %cst_25 = arith.constant 3.125000e-02 : f32
    %54 = vector.broadcast %cst_25 : f32 to vector<8x1xf32>
    %55 = arith.mulf %53, %54 : vector<8x1xf32>
    %56 = vector.broadcast %46 : vector<8x1xf32> to vector<8x128xf32>
    %57 = arith.subf %30, %56 : vector<8x128xf32>
    %cst_26 = arith.constant 9.99999974E-6 : f32
    %58 = vector.broadcast %cst_26 : f32 to vector<8x1xf32>
    %59 = arith.addf %55, %58 : vector<8x1xf32>
    %60 = math.rsqrt %59 : vector<8x1xf32>
    %61 = vector.broadcast %60 : vector<8x1xf32> to vector<8x128xf32>
    %62 = arith.mulf %57, %61 : vector<8x128xf32>
    %63 = vector.broadcast %38 : vector<1x128xf32> to vector<8x128xf32>
    %64 = arith.mulf %62, %63 : vector<8x128xf32>
    %65 = vector.broadcast %40 : vector<1x128xf32> to vector<8x128xf32>
    %66 = arith.addf %64, %65 : vector<8x128xf32>
    %67 = arith.addf %34, %66 : vector<8x128xf32>
    %c6 = arith.constant 6 : index
    %c0_27 = arith.constant 0 : index
    %68 = vector.load %arg5[%c6, %c0_27] : memref<11x256xf32, #tpu.memory_space<vmem>>, vector<1x256xf32>
    %69 = vector.extract_strided_slice %68 {offsets = [0, 0], sizes = [1, 128], strides = [1, 1]} : vector<1x256xf32> to vector<1x128xf32>
    %c7 = arith.constant 7 : index
    %c0_28 = arith.constant 0 : index
    %70 = vector.load %arg5[%c7, %c0_28] : memref<11x256xf32, #tpu.memory_space<vmem>>, vector<1x256xf32>
    %71 = vector.extract_strided_slice %70 {offsets = [0, 0], sizes = [1, 128], strides = [1, 1]} : vector<1x256xf32> to vector<1x128xf32>
    %c8 = arith.constant 8 : index
    %c0_29 = arith.constant 0 : index
    %72 = vector.load %arg5[%c8, %c0_29] : memref<11x256xf32, #tpu.memory_space<vmem>>, vector<1x256xf32>
    %73 = vector.extract_strided_slice %72 {offsets = [0, 0], sizes = [1, 128], strides = [1, 1]} : vector<1x256xf32> to vector<1x128xf32>
    %74 = vector.broadcast %69 : vector<1x128xf32> to vector<8x128xf32>
    %75 = arith.mulf %30, %74 : vector<8x128xf32>
    %cst_30 = arith.constant dense<0.000000e+00> : vector<8xf32>
    %76 = vector.multi_reduction <add>, %75, %cst_30 [1] : vector<8x128xf32> to vector<8xf32>
    %77 = vector.shape_cast %76 : vector<8xf32> to vector<8x1xf32>
    %cst_31 = arith.constant 4.000000e-02 : f32
    %78 = vector.broadcast %cst_31 : f32 to vector<8x1xf32>
    %79 = arith.mulf %77, %78 : vector<8x1xf32>
    %80 = vector.broadcast %79 : vector<8x1xf32> to vector<8x128xf32>
    %81 = arith.subf %30, %80 : vector<8x128xf32>
    %82 = vector.broadcast %69 : vector<1x128xf32> to vector<8x128xf32>
    %83 = arith.mulf %81, %82 : vector<8x128xf32>
    %84 = arith.mulf %83, %83 : vector<8x128xf32>
    %cst_32 = arith.constant dense<0.000000e+00> : vector<8xf32>
    %85 = vector.multi_reduction <add>, %84, %cst_32 [1] : vector<8x128xf32> to vector<8xf32>
    %86 = vector.shape_cast %85 : vector<8xf32> to vector<8x1xf32>
    %cst_33 = arith.constant 4.000000e-02 : f32
    %87 = vector.broadcast %cst_33 : f32 to vector<8x1xf32>
    %88 = arith.mulf %86, %87 : vector<8x1xf32>
    %89 = vector.broadcast %79 : vector<8x1xf32> to vector<8x128xf32>
    %90 = arith.subf %30, %89 : vector<8x128xf32>
    %cst_34 = arith.constant 9.99999974E-6 : f32
    %91 = vector.broadcast %cst_34 : f32 to vector<8x1xf32>
    %92 = arith.addf %88, %91 : vector<8x1xf32>
    %93 = math.rsqrt %92 : vector<8x1xf32>
    %94 = vector.broadcast %93 : vector<8x1xf32> to vector<8x128xf32>
    %95 = arith.mulf %90, %94 : vector<8x128xf32>
    %96 = vector.broadcast %71 : vector<1x128xf32> to vector<8x128xf32>
    %97 = arith.mulf %95, %96 : vector<8x128xf32>
    %98 = vector.broadcast %73 : vector<1x128xf32> to vector<8x128xf32>
    %99 = arith.addf %97, %98 : vector<8x128xf32>
    %100 = arith.addf %67, %99 : vector<8x128xf32>
    %c9 = arith.constant 9 : index
    %c0_35 = arith.constant 0 : index
    %101 = vector.load %arg5[%c9, %c0_35] : memref<11x256xf32, #tpu.memory_space<vmem>>, vector<1x256xf32>
    %102 = vector.extract_strided_slice %101 {offsets = [0, 0], sizes = [1, 128], strides = [1, 1]} : vector<1x256xf32> to vector<1x128xf32>
    %cst_36 = arith.constant 0.000000e+00 : f32
    %103 = vector.broadcast %cst_36 : f32 to vector<8x128xf32>
    %104 = arith.cmpf oge, %100, %103 : vector<8x128xf32>
    %105 = vector.broadcast %102 : vector<1x128xf32> to vector<8x128xf32>
    %106 = arith.mulf %105, %100 : vector<8x128xf32>
    %107 = arith.select %104, %100, %106 : vector<8x128xi1>, vector<8x128xf32>
    %c0_37 = arith.constant 0 : index
    %c0_38 = arith.constant 0 : index
    %c0_39 = arith.constant 0 : index
    %108 = vector.load %arg4[%c0_37, %c0_38, %c0_39] : memref<1x128x384xbf16, #tpu.memory_space<vmem>>, vector<1x128x384xbf16>
    %109 = vector.shape_cast %108 : vector<1x128x384xbf16> to vector<128x384xbf16>
    %110 = arith.truncf %107 : vector<8x128xf32> to vector<8x128xbf16>
    %cst_40 = arith.constant dense<0.000000e+00> : vector<8x384xf32>
    %111 = tpu.matmul %110, %109, %cst_40 {dimension_numbers = #tpu.dot_dimension_numbers<[1], [0], [0], [1], [0, 0, 1, 1], [], []>} : vector<8x128xbf16>, vector<128x384xbf16>, vector<8x384xf32> -> vector<8x384xf32>
    %112 = vector.extract_strided_slice %111 {offsets = [0, 256], sizes = [8, 128], strides = [1, 1]} : vector<8x384xf32> to vector<8x128xf32>
    %113 = vector.extract_strided_slice %111 {offsets = [0, 0], sizes = [8, 256], strides = [1, 1]} : vector<8x384xf32> to vector<8x256xf32>
    %114 = vector.extract_strided_slice %113 {offsets = [0, 0], sizes = [8, 128], strides = [1, 1]} : vector<8x256xf32> to vector<8x128xf32>
    %c0_41 = arith.constant 0 : index
    %c0_42 = arith.constant 0 : index
    %115 = vector.load %arg6[%c0_41, %c0_42] : memref<8x128xf32, #tpu.memory_space<vmem>>, vector<8x128xf32>
    tpu.vector_store %arg6[%c0_41, %c0_42], %114 {strides = array<i32>} : memref<8x128xf32, #tpu.memory_space<vmem>>, vector<8x128xf32>,
    %116 = vector.extract_strided_slice %113 {offsets = [0, 128], sizes = [8, 128], strides = [1, 1]} : vector<8x256xf32> to vector<8x128xf32>
    %c0_43 = arith.constant 0 : index
    %c0_44 = arith.constant 0 : index
    %117 = vector.load %arg7[%c0_43, %c0_44] : memref<8x128xf32, #tpu.memory_space<vmem>>, vector<8x128xf32>
    tpu.vector_store %arg7[%c0_43, %c0_44], %116 {strides = array<i32>} : memref<8x128xf32, #tpu.memory_space<vmem>>, vector<8x128xf32>,
    %c10 = arith.constant 10 : index
    %c0_45 = arith.constant 0 : index
    %118 = vector.load %arg5[%c10, %c0_45] : memref<11x256xf32, #tpu.memory_space<vmem>>, vector<1x256xf32>
    %119 = vector.extract_strided_slice %118 {offsets = [0, 0], sizes = [1, 128], strides = [1, 1]} : vector<1x256xf32> to vector<1x128xf32>
    %120 = vector.broadcast %119 : vector<1x128xf32> to vector<8x128xf32>
    %121 = arith.addf %112, %120 : vector<8x128xf32>
    %122 = arith.negf %121 : vector<8x128xf32>
    %123 = math.exp %122 : vector<8x128xf32>
    %cst_46 = arith.constant 1.000000e+00 : f32
    %124 = vector.broadcast %cst_46 : f32 to vector<8x128xf32>
    %125 = arith.addf %124, %123 : vector<8x128xf32>
    %126 = arith.divf %124, %125 : vector<8x128xf32>
    %c0_47 = arith.constant 0 : index
    %c0_48 = arith.constant 0 : index
    %127 = vector.load %arg8[%c0_47, %c0_48] : memref<8x128xf32, #tpu.memory_space<vmem>>, vector<8x128xf32>
    tpu.vector_store %arg8[%c0_47, %c0_48], %126 {strides = array<i32>} : memref<8x128xf32, #tpu.memory_space<vmem>>, vector<8x128xf32>,
    return
  }
  func.func @transform_0(%arg0: i32) -> (i32, i32) {
    %c0_i32 = arith.constant 0 : i32
    %c0_i32_0 = arith.constant 0 : i32
    return %arg0, %c0_i32 : i32, i32
  }
  func.func @transform_1(%arg0: i32) -> (i32, i32, i32) {
    %c0_i32 = arith.constant 0 : i32
    %c0_i32_0 = arith.constant 0 : i32
    %c0_i32_1 = arith.constant 0 : i32
    %c0_i32_2 = arith.constant 0 : i32
    return %c0_i32, %c0_i32_0, %c0_i32_1 : i32, i32, i32
  }
  func.func @transform_2(%arg0: i32) -> (i32, i32, i32) {
    %c0_i32 = arith.constant 0 : i32
    %c0_i32_0 = arith.constant 0 : i32
    %c0_i32_1 = arith.constant 0 : i32
    %c0_i32_2 = arith.constant 0 : i32
    return %c0_i32, %c0_i32_0, %c0_i32_1 : i32, i32, i32
  }
  func.func @transform_3(%arg0: i32) -> (i32, i32, i32) {
    %c0_i32 = arith.constant 0 : i32
    %c0_i32_0 = arith.constant 0 : i32
    %c0_i32_1 = arith.constant 0 : i32
    %c0_i32_2 = arith.constant 0 : i32
    return %c0_i32, %c0_i32_0, %c0_i32_1 : i32, i32, i32
  }
  func.func @transform_4(%arg0: i32) -> (i32, i32) {
    %c0_i32 = arith.constant 0 : i32
    %c0_i32_0 = arith.constant 0 : i32
    %c0_i32_1 = arith.constant 0 : i32
    return %c0_i32, %c0_i32_0 : i32, i32
  }
  func.func @transform_5(%arg0: i32) -> (i32, i32) {
    %c0_i32 = arith.constant 0 : i32
    %c0_i32_0 = arith.constant 0 : i32
    return %arg0, %c0_i32 : i32, i32
  }
  func.func @transform_6(%arg0: i32) -> (i32, i32) {
    %c0_i32 = arith.constant 0 : i32
    %c0_i32_0 = arith.constant 0 : i32
    return %arg0, %c0_i32 : i32, i32
  }
  func.func @transform_7(%arg0: i32) -> (i32, i32) {
    %c0_i32 = arith.constant 0 : i32
    %c0_i32_0 = arith.constant 0 : i32
    return %arg0, %c0_i32 : i32, i32
  }
}

</mosaic_0001>

<llo_original>
// kernel: forward.1
$region0: #{forward.1}
  #allocation0 [shape = 'u32[]', space=smem, size = 0x4, offset = 0x4, fixed_abs, tag = 'smem constant byte address 0x4 - core index']
  #allocation1 [shape = 'u32[144,128]{1,0:T(1,128)}', space=vmem, size = 0x12000, scoped, tag = 'internal scratch']
  %s0 = inlined_call_operand.vmem [shape: f32[8,256], index: 0, kind: input, shape index: {}]
  %s1 = inlined_call_operand.hbm [shape: bf16[2,256,256], index: 1, kind: input, shape index: {}]
  %s2 = inlined_call_operand.vmem [shape: bf16[1,128,128], index: 2, kind: input, shape index: {}]
  %s3 = inlined_call_operand.hbm [shape: bf16[1,128,384], index: 3, kind: input, shape index: {}]
  %s4 = inlined_call_operand.hbm [shape: f32[11,256], index: 4, kind: input, shape index: {}]
  %s5 = inlined_call_operand.vmem [shape: f32[8,128], index: 5, kind: output, shape index: {0}]
  %s6 = inlined_call_operand.vmem [shape: f32[8,128], index: 6, kind: output, shape index: {1}]
  %s7 = inlined_call_operand.vmem [shape: f32[8,128], index: 7, kind: output, shape index: {2}]
  %8 = xla_tuple %s5, %s6, %s7
  %s9 = sld [smem:[#allocation0]]
  $region58: #{forward.1} parent=0
    _
  %s11 = ssub.s32 1, %s9
  %s12 = scalar_select 0, %s11, %s9
  $region1: #{forward.1} parent=0
    #allocation2 [shape = 'u8[262144]{0}', space=vmem, size = 0x40000, scoped, tag = 'input window, operand 1, single buffered']
    #allocation3 [shape = 's32[1]{0}', space=sflag, size = 0x4, scoped, tag = 'scoped memory for forward.1']
    #allocation4 [shape = 'u8[98304]{0}', space=vmem, size = 0x18000, scoped, tag = 'input window, operand 3, single buffered']
    #allocation5 [shape = 's32[1]{0}', space=sflag, size = 0x4, scoped, tag = 'scoped memory for forward.1']
    #allocation6 [shape = 'u8[16384]{0}', space=vmem, size = 0x4000, scoped, tag = 'input window, operand 4, single buffered']
    %13 = vsyncpa [#allocation3], 0
    %14 = vsyncpa [#allocation5], 0
    // Predicated region
    $region2: #{forward.1} parent=1 // pred_check
      _
    $region3: #{forward.1} parent=1 // pred_check_branch
      %16 = sbr.rel (0) target = $region5
    $region4: #{forward.1} parent=1 // pred_region
      _
    $region5: #{forward.1} parent=1 // pred_fallthru
      _
    // Predicated region
    $region6: #{forward.1} parent=1 // pred_check
      _
    $region7: #{forward.1} parent=1 // pred_check_branch
      %18 = sbr.rel (0) target = $region9
    $region8: #{forward.1} parent=1 // pred_region
      %s20 = ssub.s32 8192, 8192
      %21 = vsyncadd [#allocation3], %s20
      %s22 = sshll.u32 [#allocation2], 4
      %s23 = int_to_ptr.vmem [resolvable:$true] %s22
      %28 = dma.hbm_to_vmem [thread:$0]  %s1, 8192, %s23, [#allocation3], 128, 128, 8
    $region9: #{forward.1} parent=1 // pred_fallthru
      _
    // Predicated region
    $region10: #{forward.1} parent=1 // pred_check
      _
    $region11: #{forward.1} parent=1 // pred_check_branch
      %30 = sbr.rel (0) target = $region13
    $region12: #{forward.1} parent=1 // pred_region
      _
    $region13: #{forward.1} parent=1 // pred_fallthru
      _
    // Predicated region
    $region14: #{forward.1} parent=1 // pred_check
      _
    $region15: #{forward.1} parent=1 // pred_check_branch
      %32 = sbr.rel (0) target = $region17
    $region16: #{forward.1} parent=1 // pred_region
      %s34 = ssub.s32 3072, 3072
      %35 = vsyncadd [#allocation5], %s34
      %s36 = sshll.u32 [#allocation4], 4
      %s37 = int_to_ptr.vmem [resolvable:$true] %s36
      %42 = dma.hbm_to_vmem [thread:$0]  %s3, 3072, %s37, [#allocation5], 192, 192, 12
    $region17: #{forward.1} parent=1 // pred_fallthru
      _
    // Predicated region
    $region18: #{forward.1} parent=1 // pred_check
      _
    $region19: #{forward.1} parent=1 // pred_check_branch
      %44 = sbr.rel (0) target = $region21
    $region20: #{forward.1} parent=1 // pred_region
      %s46 = ssub.s32 512, 512
      %47 = vsyncadd [#allocation5], %s46
      %s48 = sshll.u32 [#allocation6], 4
      %s49 = int_to_ptr.vmem [resolvable:$true] %s48
      %54 = dma.hbm_to_vmem [thread:$0]  %s4, 512, %s49, [#allocation5], 256, 256, 16
    $region21: #{forward.1} parent=1 // pred_fallthru
      _
    // Predicated region
    $region22: #{forward.1} parent=1 // pred_check
      _
    $region23: #{forward.1} parent=1 // pred_check_branch
      %56 = sbr.rel (0) target = $region25
    $region24: #{forward.1} parent=1 // pred_region
      %57 = dma.done [#allocation3], 8192
    $region25: #{forward.1} parent=1 // pred_fallthru
      _
    // Predicated region
    $region26: #{forward.1} parent=1 // pred_check
      _
    $region27: #{forward.1} parent=1 // pred_check_branch
      %59 = sbr.rel (0) target = $region29
    $region28: #{forward.1} parent=1 // pred_region
      %60 = dma.done [#allocation5], 3072
    $region29: #{forward.1} parent=1 // pred_fallthru
      _
    // Predicated region
    $region30: #{forward.1} parent=1 // pred_check
      _
    $region31: #{forward.1} parent=1 // pred_check_branch
      %62 = sbr.rel (0) target = $region33
    $region32: #{forward.1} parent=1 // pred_region
      %63 = dma.done [#allocation5], 512
    $region33: #{forward.1} parent=1 // pred_fallthru
      _
    %v65 = vld [vmem:[%s0] sm:$0xff]
    %v66 = vld [vmem:[%s0 + $0x8] sm:$0xff]
    %v67 = vld [vmem:[#allocation2] sm:$0xff]
    %v68 = vld [vmem:[#allocation2 + $0x8] sm:$0xff]
    %v69 = vld [vmem:[#allocation2 + $0x10] sm:$0xff]
    %v70 = vld [vmem:[#allocation2 + $0x18] sm:$0xff]
    %v71 = vld [vmem:[#allocation2 + $0x20] sm:$0xff]
    %v72 = vld [vmem:[#allocation2 + $0x28] sm:$0xff]
    %v73 = vld [vmem:[#allocation2 + $0x30] sm:$0xff]
    %v74 = vld [vmem:[#allocation2 + $0x38] sm:$0xff]
    %v75 = vld [vmem:[#allocation2 + $0x40] sm:$0xff]
    %v76 = vld [vmem:[#allocation2 + $0x48] sm:$0xff]
    %v77 = vld [vmem:[#allocation2 + $0x50] sm:$0xff]
    %v78 = vld [vmem:[#allocation2 + $0x58] sm:$0xff]
    %v79 = vld [vmem:[#allocation2 + $0x60] sm:$0xff]
    %v80 = vld [vmem:[#allocation2 + $0x68] sm:$0xff]
    %v81 = vld [vmem:[#allocation2 + $0x70] sm:$0xff]
    %v82 = vld [vmem:[#allocation2 + $0x78] sm:$0xff]
    %v83 = vld [vmem:[#allocation2 + $0x80] sm:$0xff]
    %v84 = vld [vmem:[#allocation2 + $0x88] sm:$0xff]
    %v85 = vld [vmem:[#allocation2 + $0x90] sm:$0xff]
    %v86 = vld [vmem:[#allocation2 + $0x98] sm:$0xff]
    %v87 = vld [vmem:[#allocation2 + $0xa0] sm:$0xff]
    %v88 = vld [vmem:[#allocation2 + $0xa8] sm:$0xff]
    %v89 = vld [vmem:[#allocation2 + $0xb0] sm:$0xff]
    %v90 = vld [vmem:[#allocation2 + $0xb8] sm:$0xff]
    %v91 = vld [vmem:[#allocation2 + $0xc0] sm:$0xff]
    %v92 = vld [vmem:[#allocation2 + $0xc8] sm:$0xff]
    %v93 = vld [vmem:[#allocation2 + $0xd0] sm:$0xff]
    %v94 = vld [vmem:[#allocation2 + $0xd8] sm:$0xff]
    %v95 = vld [vmem:[#allocation2 + $0xe0] sm:$0xff]
    %v96 = vld [vmem:[#allocation2 + $0xe8] sm:$0xff]
    %v97 = vld [vmem:[#allocation2 + $0xf0] sm:$0xff]
    %v98 = vld [vmem:[#allocation2 + $0xf8] sm:$0xff]
    %v99 = vpack.c.bf16 %v65, %v65
    %v100 = vpack.c.bf16 %v66, %v66
    %v133 = vunpack.c.l.b16 %v67
    %v134 = vunpack.c.h.b16 %v67
    %v135 = vunpack.c.l.b16 %v68
    %v136 = vunpack.c.h.b16 %v68
    %v137 = vunpack.c.l.b16 %v69
    %v138 = vunpack.c.h.b16 %v69
    %v139 = vunpack.c.l.b16 %v70
    %v140 = vunpack.c.h.b16 %v70
    %v141 = vunpack.c.l.b16 %v71
    %v142 = vunpack.c.h.b16 %v71
    %v143 = vunpack.c.l.b16 %v72
    %v144 = vunpack.c.h.b16 %v72
    %v145 = vunpack.c.l.b16 %v73
    %v146 = vunpack.c.h.b16 %v73
    %v147 = vunpack.c.l.b16 %v74
    %v148 = vunpack.c.h.b16 %v74
    %v149 = vunpack.c.l.b16 %v75
    %v150 = vunpack.c.h.b16 %v75
    %v151 = vunpack.c.l.b16 %v76
    %v152 = vunpack.c.h.b16 %v76
    %v153 = vunpack.c.l.b16 %v77
    %v154 = vunpack.c.h.b16 %v77
    %v155 = vunpack.c.l.b16 %v78
    %v156 = vunpack.c.h.b16 %v78
    %v157 = vunpack.c.l.b16 %v79
    %v158 = vunpack.c.h.b16 %v79
    %v159 = vunpack.c.l.b16 %v80
    %v160 = vunpack.c.h.b16 %v80
    %v161 = vunpack.c.l.b16 %v81
    %v162 = vunpack.c.h.b16 %v81
    %v163 = vunpack.c.l.b16 %v82
    %v164 = vunpack.c.h.b16 %v82
    %v165 = vunpack.c.l.b16 %v83
    %v166 = vunpack.c.h.b16 %v83
    %v167 = vunpack.c.l.b16 %v84
    %v168 = vunpack.c.h.b16 %v84
    %v169 = vunpack.c.l.b16 %v85
    %v170 = vunpack.c.h.b16 %v85
    %v171 = vunpack.c.l.b16 %v86
    %v172 = vunpack.c.h.b16 %v86
    %v173 = vunpack.c.l.b16 %v87
    %v174 = vunpack.c.h.b16 %v87
    %v175 = vunpack.c.l.b16 %v88
    %v176 = vunpack.c.h.b16 %v88
    %v177 = vunpack.c.l.b16 %v89
    %v178 = vunpack.c.h.b16 %v89
    %v179 = vunpack.c.l.b16 %v90
    %v180 = vunpack.c.h.b16 %v90
    %v181 = vunpack.c.l.b16 %v91
    %v182 = vunpack.c.h.b16 %v91
    %v183 = vunpack.c.l.b16 %v92
    %v184 = vunpack.c.h.b16 %v92
    %v185 = vunpack.c.l.b16 %v93
    %v186 = vunpack.c.h.b16 %v93
    %v187 = vunpack.c.l.b16 %v94
    %v188 = vunpack.c.h.b16 %v94
    %v189 = vunpack.c.l.b16 %v95
    %v190 = vunpack.c.h.b16 %v95
    %v191 = vunpack.c.l.b16 %v96
    %v192 = vunpack.c.h.b16 %v96
    %v193 = vunpack.c.l.b16 %v97
    %v194 = vunpack.c.h.b16 %v97
    %v195 = vunpack.c.l.b16 %v98
    %v196 = vunpack.c.h.b16 %v98
    %v197 = vpack.c.b16 %v135, %v133
    %v198 = vpack.c.b16 %v136, %v134
    %v199 = vpack.c.b16 %v139, %v137
    %v200 = vpack.c.b16 %v140, %v138
    %v201 = vpack.c.b16 %v143, %v141
    %v202 = vpack.c.b16 %v144, %v142
    %v203 = vpack.c.b16 %v147, %v145
    %v204 = vpack.c.b16 %v148, %v146
    %v205 = vpack.c.b16 %v151, %v149
    %v206 = vpack.c.b16 %v152, %v150
    %v207 = vpack.c.b16 %v155, %v153
    %v208 = vpack.c.b16 %v156, %v154
    %v209 = vpack.c.b16 %v159, %v157
    %v210 = vpack.c.b16 %v160, %v158
    %v211 = vpack.c.b16 %v163, %v161
    %v212 = vpack.c.b16 %v164, %v162
    %v213 = vpack.c.b16 %v167, %v165
    %v214 = vpack.c.b16 %v168, %v166
    %v215 = vpack.c.b16 %v171, %v169
    %v216 = vpack.c.b16 %v172, %v170
    %v217 = vpack.c.b16 %v175, %v173
    %v218 = vpack.c.b16 %v176, %v174
    %v219 = vpack.c.b16 %v179, %v177
    %v220 = vpack.c.b16 %v180, %v178
    %v221 = vpack.c.b16 %v183, %v181
    %v222 = vpack.c.b16 %v184, %v182
    %v223 = vpack.c.b16 %v187, %v185
    %v224 = vpack.c.b16 %v188, %v186
    %v225 = vpack.c.b16 %v191, %v189
    %v226 = vpack.c.b16 %v192, %v190
    %v227 = vpack.c.b16 %v195, %v193
    %v228 = vpack.c.b16 %v196, %v194
    %261 = vmatprep.subr.bf16.mxu0 %v198
    %262 = vmatpush1.bf16.msra.mxu0 %v197
    %263 = vmatprep.subr.bf16.mxu0 %v200
    %264 = vmatpush1.bf16.msra.mxu0 %v199
    %265 = vmatprep.subr.bf16.mxu0 %v202
    %266 = vmatpush1.bf16.msra.mxu0 %v201
    %267 = vmatprep.subr.bf16.mxu0 %v204
    %268 = vmatpush1.bf16.msra.mxu0 %v203
    %269 = vmatprep.subr.bf16.mxu0 %v206
    %270 = vmatpush1.bf16.msra.mxu0 %v205
    %271 = vmatprep.subr.bf16.mxu0 %v208
    %272 = vmatpush1.bf16.msra.mxu0 %v207
    %273 = vmatprep.subr.bf16.mxu0 %v210
    %274 = vmatpush1.bf16.msra.mxu0 %v209
    %275 = vmatprep.subr.bf16.mxu0 %v212
    %276 = vmatpush1.bf16.msra.mxu0 %v211
    %277 = vmatprep.subr.bf16.mxu0 %v214
    %278 = vmatpush1.bf16.msra.mxu0 %v213
    %279 = vmatprep.subr.bf16.mxu0 %v216
    %280 = vmatpush1.bf16.msra.mxu0 %v215
    %281 = vmatprep.subr.bf16.mxu0 %v218
    %282 = vmatpush1.bf16.msra.mxu0 %v217
    %283 = vmatprep.subr.bf16.mxu0 %v220
    %284 = vmatpush1.bf16.msra.mxu0 %v219
    %285 = vmatprep.subr.bf16.mxu0 %v222
    %286 = vmatpush1.bf16.msra.mxu0 %v221
    %287 = vmatprep.subr.bf16.mxu0 %v224
    %288 = vmatpush1.bf16.msra.mxu0 %v223
    %289 = vmatprep.subr.bf16.mxu0 %v226
    %290 = vmatpush1.bf16.msra.mxu0 %v225
    %291 = vmatprep.subr.bf16.mxu0 %v228
    %292 = vmatpush1.bf16.msra.mxu0 %v227
    %293 = vmatprep.mubr.bf16.mxu0 %v100
    %294 = vmatmul.mubr.bf16.gmra.mrb[0].mxu0 %v99
    %v295 = vpop.f32.mrb[0].mxu0
    %v296 = vadd.f32 0.0, %v295
    %v297 = vpop.f32.mrb[0].mxu0
    %v298 = vadd.f32 0.0, %v297
    %v299 = vpop.f32.mrb[0].mxu0
    %v300 = vpop.f32.mrb[0].mxu0
    %301 = vdwg.mxu0
    %v302 = vld [vmem:[#allocation6] ss:$8 sm:$0x3]
    %vm303 = vcmp.ge.f32.partialorder %v296, 0.0
    %vm304 = vcmp.ge.f32.partialorder %v298, 0.0
    %v306 = vlaneseq
    %v307 = vshrl.u32 %v306, 7
    %v308 = vsub.s32 0, %v307
    %v309 = vrot.slane %v302, %v308
    %v310 = vlaneseq
    %v311 = vshrl.u32 %v310, 7
    %v312 = vsub.s32 1, %v311
    %v313 = vrot.slane %v302, %v312
    %v316 = vmul.f32 %v309, %v296
    %v317 = vmul.f32 %v313, %v298
    %v318 = vsel %vm303, %v296, %v316
    %v319 = vsel %vm304, %v298, %v317
    %s320 = scalar_lea.vmem [#allocation2], 256
    %v321 = vld [vmem:[%s320] sm:$0xff]
    %v322 = vld [vmem:[%s320 + $0x8] sm:$0xff]
    %v323 = vld [vmem:[%s320 + $0x10] sm:$0xff]
    %v324 = vld [vmem:[%s320 + $0x18] sm:$0xff]
    %v325 = vld [vmem:[%s320 + $0x20] sm:$0xff]
    %v326 = vld [vmem:[%s320 + $0x28] sm:$0xff]
    %v327 = vld [vmem:[%s320 + $0x30] sm:$0xff]
    %v328 = vld [vmem:[%s320 + $0x38] sm:$0xff]
    %v329 = vld [vmem:[%s320 + $0x40] sm:$0xff]
    %v330 = vld [vmem:[%s320 + $0x48] sm:$0xff]
    %v331 = vld [vmem:[%s320 + $0x50] sm:$0xff]
    %v332 = vld [vmem:[%s320 + $0x58] sm:$0xff]
    %v333 = vld [vmem:[%s320 + $0x60] sm:$0xff]
    %v334 = vld [vmem:[%s320 + $0x68] sm:$0xff]
    %v335 = vld [vmem:[%s320 + $0x70] sm:$0xff]
    %v336 = vld [vmem:[%s320 + $0x78] sm:$0xff]
    %v337 = vld [vmem:[%s320 + $0x80] sm:$0xff]
    %v338 = vld [vmem:[%s320 + $0x88] sm:$0xff]
    %v339 = vld [vmem:[%s320 + $0x90] sm:$0xff]
    %v340 = vld [vmem:[%s320 + $0x98] sm:$0xff]
    %v341 = vld [vmem:[%s320 + $0xa0] sm:$0xff]
    %v342 = vld [vmem:[%s320 + $0xa8] sm:$0xff]
    %v343 = vld [vmem:[%s320 + $0xb0] sm:$0xff]
    %v344 = vld [vmem:[%s320 + $0xb8] sm:$0xff]
    %v345 = vld [vmem:[%s320 + $0xc0] sm:$0xff]
    %v346 = vld [vmem:[%s320 + $0xc8] sm:$0xff]
    %v347 = vld [vmem:[%s320 + $0xd0] sm:$0xff]
    %v348 = vld [vmem:[%s320 + $0xd8] sm:$0xff]
    %v349 = vld [vmem:[%s320 + $0xe0] sm:$0xff]
    %v350 = vld [vmem:[%s320 + $0xe8] sm:$0xff]
    %v351 = vld [vmem:[%s320 + $0xf0] sm:$0xff]
    %v352 = vld [vmem:[%s320 + $0xf8] sm:$0xff]
    %v353 = vpack.c.bf16 %v318, %v318
    %v354 = vpack.c.bf16 %v319, %v319
    %v387 = vunpack.c.l.b16 %v321
    %v388 = vunpack.c.h.b16 %v321
    %v389 = vunpack.c.l.b16 %v322
    %v390 = vunpack.c.h.b16 %v322
    %v391 = vunpack.c.l.b16 %v323
    %v392 = vunpack.c.h.b16 %v323
    %v393 = vunpack.c.l.b16 %v324
    %v394 = vunpack.c.h.b16 %v324
    %v395 = vunpack.c.l.b16 %v325
    %v396 = vunpack.c.h.b16 %v325
    %v397 = vunpack.c.l.b16 %v326
    %v398 = vunpack.c.h.b16 %v326
    %v399 = vunpack.c.l.b16 %v327
    %v400 = vunpack.c.h.b16 %v327
    %v401 = vunpack.c.l.b16 %v328
    %v402 = vunpack.c.h.b16 %v328
    %v403 = vunpack.c.l.b16 %v329
    %v404 = vunpack.c.h.b16 %v329
    %v405 = vunpack.c.l.b16 %v330
    %v406 = vunpack.c.h.b16 %v330
    %v407 = vunpack.c.l.b16 %v331
    %v408 = vunpack.c.h.b16 %v331
    %v409 = vunpack.c.l.b16 %v332
    %v410 = vunpack.c.h.b16 %v332
    %v411 = vunpack.c.l.b16 %v333
    %v412 = vunpack.c.h.b16 %v333
    %v413 = vunpack.c.l.b16 %v334
    %v414 = vunpack.c.h.b16 %v334
    %v415 = vunpack.c.l.b16 %v335
    %v416 = vunpack.c.h.b16 %v335
    %v417 = vunpack.c.l.b16 %v336
    %v418 = vunpack.c.h.b16 %v336
    %v419 = vunpack.c.l.b16 %v337
    %v420 = vunpack.c.h.b16 %v337
    %v421 = vunpack.c.l.b16 %v338
    %v422 = vunpack.c.h.b16 %v338
    %v423 = vunpack.c.l.b16 %v339
    %v424 = vunpack.c.h.b16 %v339
    %v425 = vunpack.c.l.b16 %v340
    %v426 = vunpack.c.h.b16 %v340
    %v427 = vunpack.c.l.b16 %v341
    %v428 = vunpack.c.h.b16 %v341
    %v429 = vunpack.c.l.b16 %v342
    %v430 = vunpack.c.h.b16 %v342
    %v431 = vunpack.c.l.b16 %v343
    %v432 = vunpack.c.h.b16 %v343
    %v433 = vunpack.c.l.b16 %v344
    %v434 = vunpack.c.h.b16 %v344
    %v435 = vunpack.c.l.b16 %v345
    %v436 = vunpack.c.h.b16 %v345
    %v437 = vunpack.c.l.b16 %v346
    %v438 = vunpack.c.h.b16 %v346
    %v439 = vunpack.c.l.b16 %v347
    %v440 = vunpack.c.h.b16 %v347
    %v441 = vunpack.c.l.b16 %v348
    %v442 = vunpack.c.h.b16 %v348
    %v443 = vunpack.c.l.b16 %v349
    %v444 = vunpack.c.h.b16 %v349
    %v445 = vunpack.c.l.b16 %v350
    %v446 = vunpack.c.h.b16 %v350
    %v447 = vunpack.c.l.b16 %v351
    %v448 = vunpack.c.h.b16 %v351
    %v449 = vunpack.c.l.b16 %v352
    %v450 = vunpack.c.h.b16 %v352
    %v451 = vpack.c.b16 %v389, %v387
    %v452 = vpack.c.b16 %v390, %v388
    %v453 = vpack.c.b16 %v393, %v391
    %v454 = vpack.c.b16 %v394, %v392
    %v455 = vpack.c.b16 %v397, %v395
    %v456 = vpack.c.b16 %v398, %v396
    %v457 = vpack.c.b16 %v401, %v399
    %v458 = vpack.c.b16 %v402, %v400
    %v459 = vpack.c.b16 %v405, %v403
    %v460 = vpack.c.b16 %v406, %v404
    %v461 = vpack.c.b16 %v409, %v407
    %v462 = vpack.c.b16 %v410, %v408
    %v463 = vpack.c.b16 %v413, %v411
    %v464 = vpack.c.b16 %v414, %v412
    %v465 = vpack.c.b16 %v417, %v415
    %v466 = vpack.c.b16 %v418, %v416
    %v467 = vpack.c.b16 %v421, %v419
    %v468 = vpack.c.b16 %v422, %v420
    %v469 = vpack.c.b16 %v425, %v423
    %v470 = vpack.c.b16 %v426, %v424
    %v471 = vpack.c.b16 %v429, %v427
    %v472 = vpack.c.b16 %v430, %v428
    %v473 = vpack.c.b16 %v433, %v431
    %v474 = vpack.c.b16 %v434, %v432
    %v475 = vpack.c.b16 %v437, %v435
    %v476 = vpack.c.b16 %v438, %v436
    %v477 = vpack.c.b16 %v441, %v439
    %v478 = vpack.c.b16 %v442, %v440
    %v479 = vpack.c.b16 %v445, %v443
    %v480 = vpack.c.b16 %v446, %v444
    %v481 = vpack.c.b16 %v449, %v447
    %v482 = vpack.c.b16 %v450, %v448
    %515 = vmatprep.subr.bf16.mxu0 %v452
    %516 = vmatpush1.bf16.msra.mxu0 %v451
    %517 = vmatprep.subr.bf16.mxu0 %v454
    %518 = vmatpush1.bf16.msra.mxu0 %v453
    %519 = vmatprep.subr.bf16.mxu0 %v456
    %520 = vmatpush1.bf16.msra.mxu0 %v455
    %521 = vmatprep.subr.bf16.mxu0 %v458
    %522 = vmatpush1.bf16.msra.mxu0 %v457
    %523 = vmatprep.subr.bf16.mxu0 %v460
    %524 = vmatpush1.bf16.msra.mxu0 %v459
    %525 = vmatprep.subr.bf16.mxu0 %v462
    %526 = vmatpush1.bf16.msra.mxu0 %v461
    %527 = vmatprep.subr.bf16.mxu0 %v464
    %528 = vmatpush1.bf16.msra.mxu0 %v463
    %529 = vmatprep.subr.bf16.mxu0 %v466
    %530 = vmatpush1.bf16.msra.mxu0 %v465
    %531 = vmatprep.subr.bf16.mxu0 %v468
    %532 = vmatpush1.bf16.msra.mxu0 %v467
    %533 = vmatprep.subr.bf16.mxu0 %v470
    %534 = vmatpush1.bf16.msra.mxu0 %v469
    %535 = vmatprep.subr.bf16.mxu0 %v472
    %536 = vmatpush1.bf16.msra.mxu0 %v471
    %537 = vmatprep.subr.bf16.mxu0 %v474
    %538 = vmatpush1.bf16.msra.mxu0 %v473
    %539 = vmatprep.subr.bf16.mxu0 %v476
    %540 = vmatpush1.bf16.msra.mxu0 %v475
    %541 = vmatprep.subr.bf16.mxu0 %v478
    %542 = vmatpush1.bf16.msra.mxu0 %v477
    %543 = vmatprep.subr.bf16.mxu0 %v480
    %544 = vmatpush1.bf16.msra.mxu0 %v479
    %545 = vmatprep.subr.bf16.mxu0 %v482
    %546 = vmatpush1.bf16.msra.mxu0 %v481
    %547 = vmatprep.mubr.bf16.mxu0 %v354
    %548 = vmatmul.mubr.bf16.gmra.mrb[0].mxu0 %v353
    %v549 = vpop.f32.mrb[0].mxu0
    %v550 = vadd.f32 0.0, %v549
    %v551 = vpop.f32.mrb[0].mxu0
    %v552 = vadd.f32 0.0, %v551
    %v553 = vpop.f32.mrb[0].mxu0
    %v554 = vpop.f32.mrb[0].mxu0
    %555 = vdwg.mxu0
    %v556 = vadd.f32 %v550, %v552
    %v557 = vmul.f32 %v556, 0.5
    %s558 = scalar_lea.vmem [#allocation6], 1
    %v559 = vld [vmem:[%s558] ss:$8 sm:$0x3]
    %vm560 = vcmp.ge.f32.partialorder %v557, 0.0
    %v562 = vlaneseq
    %v563 = vshrl.u32 %v562, 7
    %v564 = vsub.s32 0, %v563
    %v565 = vrot.slane %v559, %v564
    %v567 = vmul.f32 %v565, %v557
    %v568 = vsel %vm560, %v557, %v567
    %v569 = vld [vmem:[%s2] sm:$0xf]
    %v570 = vld [vmem:[%s2 + $0x4] sm:$0xf]
    %v571 = vld [vmem:[%s2 + $0x8] sm:$0xf]
    %v572 = vld [vmem:[%s2 + $0xc] sm:$0xf]
    %v573 = vld [vmem:[%s2 + $0x10] sm:$0xf]
    %v574 = vld [vmem:[%s2 + $0x14] sm:$0xf]
    %v575 = vld [vmem:[%s2 + $0x18] sm:$0xf]
    %v576 = vld [vmem:[%s2 + $0x1c] sm:$0xf]
    %v577 = vld [vmem:[%s2 + $0x20] sm:$0xf]
    %v578 = vld [vmem:[%s2 + $0x24] sm:$0xf]
    %v579 = vld [vmem:[%s2 + $0x28] sm:$0xf]
    %v580 = vld [vmem:[%s2 + $0x2c] sm:$0xf]
    %v581 = vld [vmem:[%s2 + $0x30] sm:$0xf]
    %v582 = vld [vmem:[%s2 + $0x34] sm:$0xf]
    %v583 = vld [vmem:[%s2 + $0x38] sm:$0xf]
    %v584 = vld [vmem:[%s2 + $0x3c] sm:$0xf]
    %v585 = vpack.c.bf16 %v568, %v568
    %v602 = vunpack.c.l.b16 %v569
    %v603 = vunpack.c.l.b16 %v570
    %v604 = vunpack.c.l.b16 %v571
    %v605 = vunpack.c.l.b16 %v572
    %v606 = vunpack.c.l.b16 %v573
    %v607 = vunpack.c.l.b16 %v574
    %v608 = vunpack.c.l.b16 %v575
    %v609 = vunpack.c.l.b16 %v576
    %v610 = vunpack.c.l.b16 %v577
    %v611 = vunpack.c.l.b16 %v578
    %v612 = vunpack.c.l.b16 %v579
    %v613 = vunpack.c.l.b16 %v580
    %v614 = vunpack.c.l.b16 %v581
    %v615 = vunpack.c.l.b16 %v582
    %v616 = vunpack.c.l.b16 %v583
    %v617 = vunpack.c.l.b16 %v584
    %v618 = vpack.c.b16 %v603, %v602
    %v619 = vpack.c.b16 %v605, %v604
    %v620 = vpack.c.b16 %v607, %v606
    %v621 = vpack.c.b16 %v609, %v608
    %v622 = vpack.c.b16 %v611, %v610
    %v623 = vpack.c.b16 %v613, %v612
    %v624 = vpack.c.b16 %v615, %v614
    %v625 = vpack.c.b16 %v617, %v616
    %634 = vmatprep.subr.bf16.mxu0 0
    %635 = vmatpush1.bf16.msra.mxu0 %v618
    %636 = vmatprep.subr.bf16.mxu0 0
    %637 = vmatpush1.bf16.msra.mxu0 %v619
    %638 = vmatprep.subr.bf16.mxu0 0
    %639 = vmatpush1.bf16.msra.mxu0 %v620
    %640 = vmatprep.subr.bf16.mxu0 0
    %641 = vmatpush1.bf16.msra.mxu0 %v621
    %642 = vmatprep.subr.bf16.mxu0 0
    %643 = vmatpush1.bf16.msra.mxu0 %v622
    %644 = vmatprep.subr.bf16.mxu0 0
    %645 = vmatpush1.bf16.msra.mxu0 %v623
    %646 = vmatprep.subr.bf16.mxu0 0
    %647 = vmatpush1.bf16.msra.mxu0 %v624
    %648 = vmatprep.subr.bf16.mxu0 0
    %649 = vmatpush1.bf16.msra.mxu0 %v625
    %650 = vmatprep.subr.bf16.mxu0 0
    %651 = vmatpush1.bf16.msra.mxu0 0
    %652 = vmatprep.subr.bf16.mxu0 0
    %653 = vmatpush1.bf16.msra.mxu0 0
    %654 = vmatprep.subr.bf16.mxu0 0
    %655 = vmatpush1.bf16.msra.mxu0 0
    %656 = vmatprep.subr.bf16.mxu0 0
    %657 = vmatpush1.bf16.msra.mxu0 0
    %658 = vmatprep.subr.bf16.mxu0 0
    %659 = vmatpush1.bf16.msra.mxu0 0
    %660 = vmatprep.subr.bf16.mxu0 0
    %661 = vmatpush1.bf16.msra.mxu0 0
    %662 = vmatprep.subr.bf16.mxu0 0
    %663 = vmatpush1.bf16.msra.mxu0 0
    %664 = vmatprep.subr.bf16.mxu0 0
    %665 = vmatpush1.bf16.msra.mxu0 0
    %666 = vmatprep.mubr.bf16.mxu0 0
    %667 = vmatmul.mubr.bf16.gmra.mrb[0].mxu0 %v585
    %v668 = vpop.f32.mrb[0].mxu0
    %v669 = vadd.f32 0.0, %v668
    %v670 = vpop.f32.mrb[0].mxu0
    %v671 = vpop.f32.mrb[0].mxu0
    %v672 = vpop.f32.mrb[0].mxu0
    %673 = vdwg.mxu0
    %s674 = scalar_lea.vmem [#allocation6], 2
    %v675 = vld [vmem:[%s674] ss:$8 sm:$0x3]
    %v677 = vlaneseq
    %v678 = vshrl.u32 %v677, 7
    %v679 = vsub.s32 0, %v678
    %v680 = vrot.slane %v675, %v679
    %v682 = vmul.f32 %v680, %v669
    %s683 = scalar_lea.vmem [#allocation6], 3
    %v684 = vld [vmem:[%s683] ss:$8 sm:$0x3]
    %s685 = scalar_lea.vmem [#allocation6], 4
    %v686 = vld [vmem:[%s685] ss:$8 sm:$0x3]
    %s687 = scalar_lea.vmem [#allocation6], 5
    %v688 = vld [vmem:[%s687] ss:$8 sm:$0x3]
    %v690 = vlaneseq
    %v691 = vshrl.u32 %v690, 7
    %v692 = vsub.s32 0, %v691
    %v693 = vrot.slane %v684, %v692
    %v695 = vmul.f32 %v669, %v693
    %696 = vadd.xlane.f32.xlu0 %v695
    %v697 = vpop.xlane.xlu0 %696
    %v698 = vmul.f32 %v697, 0.03125
    %v699 = vsub.f32 %v669, %v698
    %v700 = vmul.f32 %v699, %v693
    %v701 = vmul.f32 %v700, %v700
    %702 = vadd.xlane.f32.xlu0 %v701
    %v703 = vpop.xlane.xlu0 %702
    %v704 = vmul.f32 %v703, 0.03125
    %v705 = vadd.f32 %v704, 1e-05
    %v706 = vrsqrt.pop %v705
    %v707 = vmul.f32 %v699, %v706
    %v709 = vlaneseq
    %v710 = vshrl.u32 %v709, 7
    %v711 = vsub.s32 0, %v710
    %v712 = vrot.slane %v686, %v711
    %v714 = vmul.f32 %v707, %v712
    %v716 = vlaneseq
    %v717 = vshrl.u32 %v716, 7
    %v718 = vsub.s32 0, %v717
    %v719 = vrot.slane %v688, %v718
    %v721 = vadd.f32 %v714, %v719
    %v722 = vadd.f32 %v682, %v721
    %s723 = scalar_lea.vmem [#allocation6], 6
    %v724 = vld [vmem:[%s723] ss:$8 sm:$0x3]
    %s725 = scalar_lea.vmem [#allocation6], 7
    %v726 = vld [vmem:[%s725] ss:$8 sm:$0x3]
    %s727 = scalar_lea.vmem [#allocation6], 16
    %v728 = vld [vmem:[%s727] ss:$8 sm:$0x3]
    %v730 = vlaneseq
    %v731 = vshrl.u32 %v730, 7
    %v732 = vsub.s32 0, %v731
    %v733 = vrot.slane %v724, %v732
    %v735 = vmul.f32 %v669, %v733
    %736 = vadd.xlane.f32.xlu0 %v735
    %v737 = vpop.xlane.xlu0 %736
    %v738 = vmul.f32 %v737, 0.04
    %v739 = vsub.f32 %v669, %v738
    %v740 = vmul.f32 %v739, %v733
    %v741 = vmul.f32 %v740, %v740
    %742 = vadd.xlane.f32.xlu0 %v741
    %v743 = vpop.xlane.xlu0 %742
    %v744 = vmul.f32 %v743, 0.04
    %v745 = vadd.f32 %v744, 1e-05
    %v746 = vrsqrt.pop %v745
    %v747 = vmul.f32 %v739, %v746
    %v749 = vlaneseq
    %v750 = vshrl.u32 %v749, 7
    %v751 = vsub.s32 0, %v750
    %v752 = vrot.slane %v726, %v751
    %v754 = vmul.f32 %v747, %v752
    %v756 = vlaneseq
    %v757 = vshrl.u32 %v756, 7
    %v758 = vsub.s32 0, %v757
    %v759 = vrot.slane %v728, %v758
    %v761 = vadd.f32 %v754, %v759
    %v762 = vadd.f32 %v722, %v761
    %s763 = scalar_lea.vmem [#allocation6], 17
    %v764 = vld [vmem:[%s763] ss:$8 sm:$0x3]
    %vm765 = vcmp.ge.f32.partialorder %v762, 0.0
    %v767 = vlaneseq
    %v768 = vshrl.u32 %v767, 7
    %v769 = vsub.s32 0, %v768
    %v770 = vrot.slane %v764, %v769
    %v772 = vmul.f32 %v770, %v762
    %v773 = vsel %vm765, %v762, %v772
    %v774 = vld [vmem:[#allocation4] sm:$0xff]
    %v775 = vld [vmem:[#allocation4 + $0x8] sm:$0xf]
    %v776 = vld [vmem:[#allocation4 + $0xc] sm:$0xff]
    %v777 = vld [vmem:[#allocation4 + $0x14] sm:$0xf]
    %v778 = vld [vmem:[#allocation4 + $0x18] sm:$0xff]
    %v779 = vld [vmem:[#allocation4 + $0x20] sm:$0xf]
    %v780 = vld [vmem:[#allocation4 + $0x24] sm:$0xff]
    %v781 = vld [vmem:[#allocation4 + $0x2c] sm:$0xf]
    %v782 = vld [vmem:[#allocation4 + $0x30] sm:$0xff]
    %v783 = vld [vmem:[#allocation4 + $0x38] sm:$0xf]
    %v784 = vld [vmem:[#allocation4 + $0x3c] sm:$0xff]
    %v785 = vld [vmem:[#allocation4 + $0x44] sm:$0xf]
    %v786 = vld [vmem:[#allocation4 + $0x48] sm:$0xff]
    %v787 = vld [vmem:[#allocation4 + $0x50] sm:$0xf]
    %v788 = vld [vmem:[#allocation4 + $0x54] sm:$0xff]
    %v789 = vld [vmem:[#allocation4 + $0x5c] sm:$0xf]
    %v790 = vld [vmem:[#allocation4 + $0x60] sm:$0xff]
    %v791 = vld [vmem:[#allocation4 + $0x68] sm:$0xf]
    %v792 = vld [vmem:[#allocation4 + $0x6c] sm:$0xff]
    %v793 = vld [vmem:[#allocation4 + $0x74] sm:$0xf]
    %v794 = vld [vmem:[#allocation4 + $0x78] sm:$0xff]
    %v795 = vld [vmem:[#allocation4 + $0x80] sm:$0xf]
    %v796 = vld [vmem:[#allocation4 + $0x84] sm:$0xff]
    %v797 = vld [vmem:[#allocation4 + $0x8c] sm:$0xf]
    %v798 = vld [vmem:[#allocation4 + $0x90] sm:$0xff]
    %v799 = vld [vmem:[#allocation4 + $0x98] sm:$0xf]
    %v800 = vld [vmem:[#allocation4 + $0x9c] sm:$0xff]
    %v801 = vld [vmem:[#allocation4 + $0xa4] sm:$0xf]
    %v802 = vld [vmem:[#allocation4 + $0xa8] sm:$0xff]
    %v803 = vld [vmem:[#allocation4 + $0xb0] sm:$0xf]
    %v804 = vld [vmem:[#allocation4 + $0xb4] sm:$0xff]
    %v805 = vld [vmem:[#allocation4 + $0xbc] sm:$0xf]
    %v806 = vpack.c.bf16 %v773, %v773
    %v839 = vunpack.c.l.b16 %v774
    %v840 = vunpack.c.h.b16 %v774
    %v841 = vunpack.c.l.b16 %v775
    %v842 = vunpack.c.l.b16 %v776
    %v843 = vunpack.c.h.b16 %v776
    %v844 = vunpack.c.l.b16 %v777
    %v845 = vunpack.c.l.b16 %v778
    %v846 = vunpack.c.h.b16 %v778
    %v847 = vunpack.c.l.b16 %v779
    %v848 = vunpack.c.l.b16 %v780
    %v849 = vunpack.c.h.b16 %v780
    %v850 = vunpack.c.l.b16 %v781
    %v851 = vunpack.c.l.b16 %v782
    %v852 = vunpack.c.h.b16 %v782
    %v853 = vunpack.c.l.b16 %v783
    %v854 = vunpack.c.l.b16 %v784
    %v855 = vunpack.c.h.b16 %v784
    %v856 = vunpack.c.l.b16 %v785
    %v857 = vunpack.c.l.b16 %v786
    %v858 = vunpack.c.h.b16 %v786
    %v859 = vunpack.c.l.b16 %v787
    %v860 = vunpack.c.l.b16 %v788
    %v861 = vunpack.c.h.b16 %v788
    %v862 = vunpack.c.l.b16 %v789
    %v863 = vunpack.c.l.b16 %v790
    %v864 = vunpack.c.h.b16 %v790
    %v865 = vunpack.c.l.b16 %v791
    %v866 = vunpack.c.l.b16 %v792
    %v867 = vunpack.c.h.b16 %v792
    %v868 = vunpack.c.l.b16 %v793
    %v869 = vunpack.c.l.b16 %v794
    %v870 = vunpack.c.h.b16 %v794
    %v871 = vunpack.c.l.b16 %v795
    %v872 = vunpack.c.l.b16 %v796
    %v873 = vunpack.c.h.b16 %v796
    %v874 = vunpack.c.l.b16 %v797
    %v875 = vunpack.c.l.b16 %v798
    %v876 = vunpack.c.h.b16 %v798
    %v877 = vunpack.c.l.b16 %v799
    %v878 = vunpack.c.l.b16 %v800
    %v879 = vunpack.c.h.b16 %v800
    %v880 = vunpack.c.l.b16 %v801
    %v881 = vunpack.c.l.b16 %v802
    %v882 = vunpack.c.h.b16 %v802
    %v883 = vunpack.c.l.b16 %v803
    %v884 = vunpack.c.l.b16 %v804
    %v885 = vunpack.c.h.b16 %v804
    %v886 = vunpack.c.l.b16 %v805
    %v887 = vpack.c.b16 %v842, %v839
    %v888 = vpack.c.b16 %v843, %v840
    %v889 = vpack.c.b16 %v844, %v841
    %v890 = vpack.c.b16 %v848, %v845
    %v891 = vpack.c.b16 %v849, %v846
    %v892 = vpack.c.b16 %v850, %v847
    %v893 = vpack.c.b16 %v854, %v851
    %v894 = vpack.c.b16 %v855, %v852
    %v895 = vpack.c.b16 %v856, %v853
    %v896 = vpack.c.b16 %v860, %v857
    %v897 = vpack.c.b16 %v861, %v858
    %v898 = vpack.c.b16 %v862, %v859
    %v899 = vpack.c.b16 %v866, %v863
    %v900 = vpack.c.b16 %v867, %v864
    %v901 = vpack.c.b16 %v868, %v865
    %v902 = vpack.c.b16 %v872, %v869
    %v903 = vpack.c.b16 %v873, %v870
    %v904 = vpack.c.b16 %v874, %v871
    %v905 = vpack.c.b16 %v878, %v875
    %v906 = vpack.c.b16 %v879, %v876
    %v907 = vpack.c.b16 %v880, %v877
    %v908 = vpack.c.b16 %v884, %v881
    %v909 = vpack.c.b16 %v885, %v882
    %v910 = vpack.c.b16 %v886, %v883
    %935 = vmatprep.subr.bf16.mxu0 %v888
    %936 = vmatpush1.bf16.msra.mxu0 %v887
    %937 = vmatprep.subr.bf16.mxu0 %v891
    %938 = vmatpush1.bf16.msra.mxu0 %v890
    %939 = vmatprep.subr.bf16.mxu0 %v894
    %940 = vmatpush1.bf16.msra.mxu0 %v893
    %941 = vmatprep.subr.bf16.mxu0 %v897
    %942 = vmatpush1.bf16.msra.mxu0 %v896
    %943 = vmatprep.subr.bf16.mxu0 %v900
    %944 = vmatpush1.bf16.msra.mxu0 %v899
    %945 = vmatprep.subr.bf16.mxu0 %v903
    %946 = vmatpush1.bf16.msra.mxu0 %v902
    %947 = vmatprep.subr.bf16.mxu0 %v906
    %948 = vmatpush1.bf16.msra.mxu0 %v905
    %949 = vmatprep.subr.bf16.mxu0 %v909
    %950 = vmatpush1.bf16.msra.mxu0 %v908
    %951 = vmatprep.subr.bf16.mxu0 0
    %952 = vmatpush1.bf16.msra.mxu0 0
    %953 = vmatprep.subr.bf16.mxu0 0
    %954 = vmatpush1.bf16.msra.mxu0 0
    %955 = vmatprep.subr.bf16.mxu0 0
    %956 = vmatpush1.bf16.msra.mxu0 0
    %957 = vmatprep.subr.bf16.mxu0 0
    %958 = vmatpush1.bf16.msra.mxu0 0
    %959 = vmatprep.subr.bf16.mxu0 0
    %960 = vmatpush1.bf16.msra.mxu0 0
    %961 = vmatprep.subr.bf16.mxu0 0
    %962 = vmatpush1.bf16.msra.mxu0 0
    %963 = vmatprep.subr.bf16.mxu0 0
    %964 = vmatpush1.bf16.msra.mxu0 0
    %965 = vmatprep.subr.bf16.mxu0 0
    %966 = vmatpush1.bf16.msra.mxu0 0
    %967 = vmatprep.mubr.bf16.mxu0 0
    %968 = vmatmul.mubr.bf16.gmra.mrb[0].mxu0 %v806
    %v969 = vpop.f32.mrb[0].mxu0
    %v970 = vadd.f32 0.0, %v969
    %v971 = vpop.f32.mrb[0].mxu0
    %v972 = vadd.f32 0.0, %v971
    %v973 = vpop.f32.mrb[0].mxu0
    %v974 = vpop.f32.mrb[0].mxu0
    %975 = vdwg.mxu0
    %976 = vmatprep.subr.bf16.mxu0 0
    %977 = vmatpush1.bf16.msra.mxu0 %v889
    %978 = vmatprep.subr.bf16.mxu0 0
    %979 = vmatpush1.bf16.msra.mxu0 %v892
    %980 = vmatprep.subr.bf16.mxu0 0
    %981 = vmatpush1.bf16.msra.mxu0 %v895
    %982 = vmatprep.subr.bf16.mxu0 0
    %983 = vmatpush1.bf16.msra.mxu0 %v898
    %984 = vmatprep.subr.bf16.mxu0 0
    %985 = vmatpush1.bf16.msra.mxu0 %v901
    %986 = vmatprep.subr.bf16.mxu0 0
    %987 = vmatpush1.bf16.msra.mxu0 %v904
    %988 = vmatprep.subr.bf16.mxu0 0
    %989 = vmatpush1.bf16.msra.mxu0 %v907
    %990 = vmatprep.subr.bf16.mxu0 0
    %991 = vmatpush1.bf16.msra.mxu0 %v910
    %992 = vmatprep.subr.bf16.mxu0 0
    %993 = vmatpush1.bf16.msra.mxu0 0
    %994 = vmatprep.subr.bf16.mxu0 0
    %995 = vmatpush1.bf16.msra.mxu0 0
    %996 = vmatprep.subr.bf16.mxu0 0
    %997 = vmatpush1.bf16.msra.mxu0 0
    %998 = vmatprep.subr.bf16.mxu0 0
    %999 = vmatpush1.bf16.msra.mxu0 0
    %1000 = vmatprep.subr.bf16.mxu0 0
    %1001 = vmatpush1.bf16.msra.mxu0 0
    %1002 = vmatprep.subr.bf16.mxu0 0
    %1003 = vmatpush1.bf16.msra.mxu0 0
    %1004 = vmatprep.subr.bf16.mxu0 0
    %1005 = vmatpush1.bf16.msra.mxu0 0
    %1006 = vmatprep.subr.bf16.mxu0 0
    %1007 = vmatpush1.bf16.msra.mxu0 0
    %1008 = vmatprep.mubr.bf16.mxu0 0
    %1009 = vmatmul.mubr.bf16.gmra.mrb[0].mxu0 %v806
    %v1010 = vpop.f32.mrb[0].mxu0
    %v1011 = vadd.f32 0.0, %v1010
    %v1012 = vpop.f32.mrb[0].mxu0
    %v1013 = vpop.f32.mrb[0].mxu0
    %v1014 = vpop.f32.mrb[0].mxu0
    %1015 = vdwg.mxu0
    %1016 = vst [vmem:[%s5] sm:$0xff] %v970
    %1017 = vst [vmem:[%s6] sm:$0xff] %v972
    %s1018 = scalar_lea.vmem [#allocation6], 18
    %v1019 = vld [vmem:[%s1018] ss:$8 sm:$0x3]
    %v1021 = vlaneseq
    %v1022 = vshrl.u32 %v1021, 7
    %v1023 = vsub.s32 0, %v1022
    %v1024 = vrot.slane %v1019, %v1023
    %v1026 = vadd.f32 %v1011, %v1024
    %v1027 = vxor.u32 %v1026, 2147483648
    %v1028 = vmul.f32 %v1027, 1.442695
    %v1029 = vpow.pop %v1028
    %v1030 = vadd.f32 %v1029, 1.0
    %v1031 = vrcp.pop %v1030
    %v1032 = vmul.f32 1.0, %v1031
    %1033 = vst [vmem:[%s7] sm:$0xff] %v1032
    // Predicated region
    $region34: #{forward.1} parent=1 // pred_check
      _
    $region35: #{forward.1} parent=1 // pred_check_branch
      %1035 = sbr.rel (0) target = $region37
    $region36: #{forward.1} parent=1 // pred_region
      _
    $region37: #{forward.1} parent=1 // pred_fallthru
      _
    // Predicated region
    $region38: #{forward.1} parent=1 // pred_check
      _
    $region39: #{forward.1} parent=1 // pred_check_branch
      %1037 = sbr.rel (0) target = $region41
    $region40: #{forward.1} parent=1 // pred_region
      _
    $region41: #{forward.1} parent=1 // pred_fallthru
      _
    // Predicated region
    $region42: #{forward.1} parent=1 // pred_check
      _
    $region43: #{forward.1} parent=1 // pred_check_branch
      %1039 = sbr.rel (0) target = $region45
    $region44: #{forward.1} parent=1 // pred_region
      _
    $region45: #{forward.1} parent=1 // pred_fallthru
      _
    // Predicated region
    $region46: #{forward.1} parent=1 // pred_check
      _
    $region47: #{forward.1} parent=1 // pred_check_branch
      %1041 = sbr.rel (0) target = $region49
    $region48: #{forward.1} parent=1 // pred_region
      _
    $region49: #{forward.1} parent=1 // pred_fallthru
      _
    // Predicated region
    $region50: #{forward.1} parent=1 // pred_check
      _
    $region51: #{forward.1} parent=1 // pred_check_branch
      %1043 = sbr.rel (0) target = $region53
    $region52: #{forward.1} parent=1 // pred_region
      _
    $region53: #{forward.1} parent=1 // pred_fallthru
      _
    // Predicated region
    $region54: #{forward.1} parent=1 // pred_check
      _
    $region55: #{forward.1} parent=1 // pred_check_branch
      %1045 = sbr.rel (0) target = $region57
    $region56: #{forward.1} parent=1 // pred_region
      _
    $region57: #{forward.1} parent=1 // pred_fallthru
      _
    %1046 = vsyncpa [#allocation3], 1
    %1047 = vsyncpa [#allocation5], 1

</llo_original>
